<compile_context>
chip_gen: v5e
topology: v5e:2x2
jax: 0.10.0
libtpu: 0.0.40
codegen_flags: <defaults>
</compile_context>

<pallas_src>
import functools

import jax
import jax.numpy as jnp
from jax import lax
from jax.experimental import pallas as pl
from jax.experimental.pallas import tpu as pltpu


def bicubic_taps(scale_factor, a=-0.75):
    """Reproduces the `kernels` buffer from BicubicUpsampler.__init__: shape (f, 4)."""
    cubic = jnp.array(
        [[0.0, a, -2.0 * a, a],
         [1.0, 0.0, -(a + 3.0), a + 2.0],
         [0.0, -a, 2.0 * a + 3.0, -(a + 2.0)],
         [0.0, 0.0, a, -a]],
        dtype=jnp.float32,
    )
    rows = []
    for d in range(scale_factor):
        s = 1.0 * d / scale_factor
        rows.append(cubic @ jnp.array([1.0, s, s ** 2, s ** 3], dtype=jnp.float32))
    return jnp.stack(rows)  # (f, 4)


def folded_interp_matrix(taps, size):
    """M of shape (f*size, size) with the replicate pad (top=1, bottom=2) folded in.

    M[i*f + d, clamp(i + k - 1, 0, size-1)] += taps[d, k], so M @ x performs the bicubic
    pass along the leading axis of an *unpadded* image.
    """
    f = taps.shape[0]
    i = jnp.arange(size)[:, None, None]                      # (size, 1, 1)
    d = jnp.arange(f)[None, :, None]                         # (1, f, 1)
    k = jnp.arange(4)[None, None, :]                         # (1, 1, 4)
    rows = jnp.broadcast_to(i * f + d, (size, f, 4))
    cols = jnp.broadcast_to(jnp.clip(i + k - 1, 0, size - 1), (size, f, 4))
    vals = jnp.broadcast_to(taps[None, :, :], (size, f, 4))
    M = jnp.zeros((f * size, size), dtype=jnp.float32)
    return M.at[rows, cols].add(vals)


def _bicubic_kernel(hm_ref, wm_ref, x_ref, o_ref, mid_ref, *, compute_dtype):
    # hm_ref : (f*h, hp)      vertical-pass matrix (pad folded; zero cols for hp > h)
    # wm_ref : (w, fwp)       horizontal-pass matrix (pad folded; lane-padded to 128*)
    # x_ref  : (B, hp, w)     block of B input images (rows zero-padded to hp)
    # o_ref  : (B, f*h, fwp)  output block (lane dim multiple of 128 -> dense vst)
    # mid_ref: (B, hp, fwp)   f32 scratch for the horizontal-pass result
    b, hp, w = x_ref.shape
    fwp = wm_ref.shape[1]

    x = x_ref[...]
    if x.dtype != compute_dtype:
        x = x.astype(compute_dtype)

    # Horizontal pass: one wide MXU matmul over the flattened image batch.
    # hp is sublane-aligned, so the (B, hp, w) -> (B*hp, w) collapse is a free view.
    mid = jnp.dot(x.reshape(b * hp, w), wm_ref[...],
                  preferred_element_type=jnp.float32)          # (B*hp, fwp) f32
    mid_ref[...] = mid.reshape(b, hp, fwp)

    hm = hm_ref[...]

    # Vertical pass: per-image 2-D MXU matmul, cast + stored immediately into o_ref[i]
    # (no broadcast of HM over the batch, no (B, f*h, fwp) f32 temporary).
    def body(i, carry):
        m = mid_ref[i]                                         # (hp, fwp) f32
        if compute_dtype != jnp.float32:
            m = m.astype(compute_dtype)
        o_ref[i] = jnp.dot(hm, m,
                           preferred_element_type=jnp.float32).astype(o_ref.dtype)
        return carry

    lax.fori_loop(0, b, body, 0, unroll=True)


def _sublane(itemsize):
    return {4: 8, 2: 16, 1: 32}.get(int(itemsize), 8)


def _vmem_capacity_bytes():
    # Generation aware: ~128 MiB on v5e/v6e, ~64 MiB per TensorCore on v7x.
    try:
        return int(pltpu.get_tpu_info().vmem_capacity_bytes)
    except Exception:
        return 128 << 20


def _pick_image_block(nc, hp, w, fh, fwp, in_itemsize, c_itemsize, budget_bytes):
    """Largest B (<=32) whose VMEM working set fits the budget; 0 => doesn't fit at all."""
    # Single-buffered resident constants + one live f32 vertical-pass tile.
    const = c_itemsize * (fh * hp + w * fwp) + 4 * fh * fwp
    # Per image: double-buffered input/output blocks + f32 mid scratch + cast copy of x.
    per_image = (in_itemsize * 2 * (hp * w + fh * fwp)
                 + 4 * hp * fwp
                 + c_itemsize * hp * w)
    avail = budget_bytes - const
    if avail < per_image:
        return 0                       # dense matrices don't fit even at B=1 -> fallback
    b = int(min(nc, 32, avail // per_image))
    # Keep the grid >= 4 steps when possible: software pipelining (DMA/compute overlap)
    # and >= 2 steps so both v7x TensorCores get work with dimension_semantics=parallel.
    if nc >= 4:
        b = min(b, nc // 4)
    elif nc >= 2:
        b = min(b, nc // 2)
    return max(1, b)


@functools.partial(jax.jit, static_argnames=("scale_factor", "a", "use_bf16_mxu"))
def bicubic_upsample(x, scale_factor, a=-0.75, use_bf16_mxu=False):
    n, c, h, w = x.shape
    f = scale_factor
    fh, fw = f * h, f * w
    fwp = ((fw + 127) // 128) * 128            # lane-dense output width (unmasked vst)

    taps = bicubic_taps(f, a)
    HM0 = folded_interp_matrix(taps, h)        # (f*h, h)   float32
    WM0 = folded_interp_matrix(taps, w).T      # (w, f*w)   float32

    # Compute dtype for the MXU operands; interpolation matrices stay floating point
    # (never silently demoted to an integer input dtype).
    if x.dtype == jnp.bfloat16 or (use_bf16_mxu and jnp.issubdtype(x.dtype, jnp.floating)):
        cdt = jnp.bfloat16
    else:
        cdt = jnp.float32

    in_itemsize = jnp.dtype(x.dtype).itemsize
    c_itemsize = jnp.dtype(cdt).itemsize
    sub = _sublane(in_itemsize)
    hp = ((h + sub - 1) // sub) * sub          # sublane-aligned row count

    nc = n * c
    cap = _vmem_capacity_bytes()
    budget = int(0.70 * cap)
    B = _pick_image_block(nc, hp, w, fh, fwp, in_itemsize, c_itemsize, budget)

    if B == 0:
        # TODO(synk): band-tiled (4-tap FMA) kernel + spatial tiling for very large h/w;
        # the dense HM/WM working set does not fit VMEM here, fall back to plain XLA.
        out = jnp.einsum("ih,nchw,wj->ncij", HM0, x.astype(jnp.float32), WM0)
        return out.astype(x.dtype)

    steps = -(-nc // B)                        # pad the ragged tail instead of shrinking B
    nc_pad = steps * B

    HM = HM0
    WM = WM0
    if hp != h:
        HM = jnp.pad(HM, ((0, 0), (0, hp - h)))     # zero cols: padded rows contribute 0
    if fwp != fw:
        WM = jnp.pad(WM, ((0, 0), (0, fwp - fw)))   # zero cols -> dense output stores
    HM = HM.astype(cdt)
    WM = WM.astype(cdt)

    xb = x.reshape(nc, h, w)
    if nc_pad != nc or hp != h:
        xb = jnp.pad(xb, ((0, nc_pad - nc), (0, hp - h), (0, 0)))

    vmem_limit = int(0.75 * cap)               # generation-aware scoped VMEM limit

    kernel = functools.partial(_bicubic_kernel, compute_dtype=cdt)

    out = pl.pallas_call(
        kernel,
        out_shape=jax.ShapeDtypeStruct((nc_pad, fh, fwp), x.dtype),
        grid=(nc_pad // B,),
        in_specs=[
            # Grid-invariant constants: single-buffered (default pipelining would keep a
            # useless duplicate VMEM buffer of each).
            pl.BlockSpec((fh, hp), lambda b: (0, 0), pipeline_mode=pl.Buffered(1)),
            pl.BlockSpec((w, fwp), lambda b: (0, 0), pipeline_mode=pl.Buffered(1)),
            pl.BlockSpec((B, hp, w), lambda b: (b, 0, 0)),     # input image block
        ],
        out_specs=pl.BlockSpec((B, fh, fwp), lambda b: (b, 0, 0)),
        scratch_shapes=[pltpu.VMEM((B, hp, fwp), jnp.float32)],
        compiler_params=pltpu.CompilerParams(
            dimension_semantics=("parallel",),
            vmem_limit_bytes=vmem_limit,
        ),
    )(HM, WM, xb)

    if nc_pad != nc:
        out = out[:nc]
    if fwp != fw:
        # NOTE: wrapper-side de-pad is one extra HBM pass over the output; if the
        # downstream consumer can accept the 128-padded lane dim, skip this slice.
        out = out[:, :, :fw]
    return out.reshape(n, c, fh, fw)


def ref_bicubic(x, scale_factor, a=-0.75):
    """Direct (non-separable) reference of the PyTorch forward semantics, pure JAX."""
    taps = bicubic_taps(scale_factor, a)
    n, c, h, w = x.shape
    f = scale_factor
    xp = jnp.pad(x, ((0, 0), (0, 0), (1, 2), (1, 2)), mode="edge")
    wins = jnp.stack(
        [jnp.stack([xp[:, :, ki:ki + h, kj:kj + w] for kj in range(4)], axis=-1)
         for ki in range(4)],
        axis=-2,
    )  # (n, c, h, w, ki, kj)
    out = jnp.einsum("dk,el,nchwkl->nchdwe", taps, taps, wins)
    return out.reshape(n, c, f * h, f * w)


if __name__ == "__main__":
    key = jax.random.PRNGKey(0)
    n, c, h, w = 2, 4, 16, 16
    scale_factor = 2
    x = jax.random.normal(key, (n, c, h, w), dtype=jnp.float32)

    out = bicubic_upsample(x, scale_factor=scale_factor)
    out = jax.block_until_ready(out)

    ref = ref_bicubic(x, scale_factor)
    assert out.shape == (n, c, scale_factor * h, scale_factor * w)
    assert jnp.allclose(out, ref, atol=1e-4, rtol=1e-4)

    print("KERNEL_OK")
</pallas_src>

<mosaic_0001>
module attributes {stable_mosaic.version = 11 : i64} {
  func.func @_bicubic_kernel(%arg0: i32, %arg1: memref<32x16xf32, #tpu.memory_space<vmem>>, %arg2: memref<16x128xf32, #tpu.memory_space<vmem>>, %arg3: memref<2x16x16xf32, #tpu.memory_space<vmem>>, %arg4: memref<2x32x128xf32, #tpu.memory_space<vmem>>, %arg5: memref<2x16x128xf32, #tpu.memory_space<vmem>>) attributes {dimension_semantics = [#tpu.dimension_semantics<parallel>], iteration_bounds = array<i64: 4>, scalar_prefetch = 0 : i64, scratch_operands = 1 : i64, tpu.core_type = #tpu.core_type<tc>, window_params = [{pipeline_mode = #tpu.pipeline_mode<synchronous>, transform_indices = @transform_0, window_bounds = array<i64: 32, 16>}, {pipeline_mode = #tpu.pipeline_mode<synchronous>, transform_indices = @transform_1, window_bounds = array<i64: 16, 128>}, {transform_indices = @transform_2, window_bounds = array<i64: 2, 16, 16>}, {transform_indices = @transform_3, window_bounds = array<i64: 2, 32, 128>}]} {
    %c0 = arith.constant 0 : index
    %c0_0 = arith.constant 0 : index
    %c0_1 = arith.constant 0 : index
    %0 = vector.load %arg3[%c0, %c0_0, %c0_1] : memref<2x16x16xf32, #tpu.memory_space<vmem>>, vector<2x16x16xf32>
    %1 = vector.shape_cast %0 : vector<2x16x16xf32> to vector<32x16xf32>
    %c0_2 = arith.constant 0 : index
    %c0_3 = arith.constant 0 : index
    %2 = vector.load %arg2[%c0_2, %c0_3] : memref<16x128xf32, #tpu.memory_space<vmem>>, vector<16x128xf32>
    %cst = arith.constant dense<0.000000e+00> : vector<32x128xf32>
    %3 = tpu.matmul %1, %2, %cst {dimension_numbers = #tpu.dot_dimension_numbers<[1], [0], [0], [1], [0, 0, 1, 1], [], []>} : vector<32x16xf32>, vector<16x128xf32>, vector<32x128xf32> -> vector<32x128xf32>
    %4 = vector.shape_cast %3 : vector<32x128xf32> to vector<2x16x128xf32>
    %c0_4 = arith.constant 0 : index
    %c0_5 = arith.constant 0 : index
    %c0_6 = arith.constant 0 : index
    %5 = vector.load %arg5[%c0_4, %c0_5, %c0_6] : memref<2x16x128xf32, #tpu.memory_space<vmem>>, vector<2x16x128xf32>
    tpu.vector_store %arg5[%c0_4, %c0_5, %c0_6], %4 {strides = array<i32>} : memref<2x16x128xf32, #tpu.memory_space<vmem>>, vector<2x16x128xf32>,
    %c0_7 = arith.constant 0 : index
    %c0_8 = arith.constant 0 : index
    %6 = vector.load %arg1[%c0_7, %c0_8] : memref<32x16xf32, #tpu.memory_space<vmem>>, vector<32x16xf32>
    %c0_i32 = arith.constant 0 : i32
    %7 = arith.index_cast %c0_i32 : i32 to index
    %c0_9 = arith.constant 0 : index
    %c0_10 = arith.constant 0 : index
    %8 = vector.load %arg5[%7, %c0_9, %c0_10] : memref<2x16x128xf32, #tpu.memory_space<vmem>>, vector<1x16x128xf32>
    %9 = vector.shape_cast %8 : vector<1x16x128xf32> to vector<16x128xf32>
    %cst_11 = arith.constant dense<0.000000e+00> : vector<32x128xf32>
    %10 = tpu.matmul %6, %9, %cst_11 {dimension_numbers = #tpu.dot_dimension_numbers<[1], [0], [0], [1], [0, 0, 1, 1], [], []>} : vector<32x16xf32>, vector<16x128xf32>, vector<32x128xf32> -> vector<32x128xf32>
    %11 = arith.index_cast %c0_i32 : i32 to index
    %c0_12 = arith.constant 0 : index
    %c0_13 = arith.constant 0 : index
    %12 = vector.load %arg4[%11, %c0_12, %c0_13] : memref<2x32x128xf32, #tpu.memory_space<vmem>>, vector<1x32x128xf32>
    %13 = vector.shape_cast %12 : vector<1x32x128xf32> to vector<32x128xf32>
    %14 = vector.shape_cast %10 : vector<32x128xf32> to vector<1x32x128xf32>
    tpu.vector_store %arg4[%11, %c0_12, %c0_13], %14 {strides = array<i32>} : memref<2x32x128xf32, #tpu.memory_space<vmem>>, vector<1x32x128xf32>,
    %c1_i32 = arith.constant 1 : i32
    %15 = arith.index_cast %c1_i32 : i32 to index
    %c0_14 = arith.constant 0 : index
    %c0_15 = arith.constant 0 : index
    %16 = vector.load %arg5[%15, %c0_14, %c0_15] : memref<2x16x128xf32, #tpu.memory_space<vmem>>, vector<1x16x128xf32>
    %17 = vector.shape_cast %16 : vector<1x16x128xf32> to vector<16x128xf32>
    %cst_16 = arith.constant dense<0.000000e+00> : vector<32x128xf32>
    %18 = tpu.matmul %6, %17, %cst_16 {dimension_numbers = #tpu.dot_dimension_numbers<[1], [0], [0], [1], [0, 0, 1, 1], [], []>} : vector<32x16xf32>, vector<16x128xf32>, vector<32x128xf32> -> vector<32x128xf32>
    %19 = arith.index_cast %c1_i32 : i32 to index
    %c0_17 = arith.constant 0 : index
    %c0_18 = arith.constant 0 : index
    %20 = vector.load %arg4[%19, %c0_17, %c0_18] : memref<2x32x128xf32, #tpu.memory_space<vmem>>, vector<1x32x128xf32>
    %21 = vector.shape_cast %20 : vector<1x32x128xf32> to vector<32x128xf32>
    %22 = vector.shape_cast %18 : vector<32x128xf32> to vector<1x32x128xf32>
    tpu.vector_store %arg4[%19, %c0_17, %c0_18], %22 {strides = array<i32>} : memref<2x32x128xf32, #tpu.memory_space<vmem>>, vector<1x32x128xf32>,
    %c2_i32 = arith.constant 2 : i32
    return
  }
  func.func @transform_0(%arg0: i32) -> (i32, i32) {
    %c0_i32 = arith.constant 0 : i32
    %c0_i32_0 = arith.constant 0 : i32
    %c0_i32_1 = arith.constant 0 : i32
    return %c0_i32, %c0_i32_0 : i32, i32
  }
  func.func @transform_1(%arg0: i32) -> (i32, i32) {
    %c0_i32 = arith.constant 0 : i32
    %c0_i32_0 = arith.constant 0 : i32
    %c0_i32_1 = arith.constant 0 : i32
    return %c0_i32, %c0_i32_0 : i32, i32
  }
  func.func @transform_2(%arg0: i32) -> (i32, i32, i32) {
    %c0_i32 = arith.constant 0 : i32
    %c0_i32_0 = arith.constant 0 : i32
    %c0_i32_1 = arith.constant 0 : i32
    return %arg0, %c0_i32, %c0_i32_0 : i32, i32, i32
  }
  func.func @transform_3(%arg0: i32) -> (i32, i32, i32) {
    %c0_i32 = arith.constant 0 : i32
    %c0_i32_0 = arith.constant 0 : i32
    %c0_i32_1 = arith.constant 0 : i32
    return %arg0, %c0_i32, %c0_i32_0 : i32, i32, i32
  }
}

</mosaic_0001>

<llo_original>
// kernel: bicubic_upsample.1
$region0: #{bicubic_upsample.1}
  #allocation0 [shape = 'u32[]', space=smem, size = 0x4, offset = 0x4, fixed_abs, tag = 'smem constant byte address 0x4 - core index']
  #allocation1 [shape = 'u32[72,128]{1,0:T(1,128)}', space=vmem, size = 0x9000, scoped, tag = 'internal scratch']
  #allocation2 [shape = 'f32[2,16,128]{2,1,0:T(8,128)}', space=vmem, size = 0x4000, scoped, tag = 'scratch operand']
  %s0 = inlined_call_operand.vmem [shape: f32[32,16], index: 0, kind: input, shape index: {}]
  %s1 = inlined_call_operand.vmem [shape: f32[16,128], index: 1, kind: input, shape index: {}]
  %s2 = inlined_call_operand.vmem [shape: f32[8,16,16], index: 2, kind: input, shape index: {}]
  %s3 = inlined_call_operand.hbm [shape: f32[8,32,128], index: 3, kind: output, shape index: {}]
  %s4 = sld [smem:[#allocation0]]
  $region45: #{bicubic_upsample.1} parent=0
    _
  %s6 = ssub.s32 1, %s4
  %s7 = scalar_select 0, %s6, %s4
  $region1: #{bicubic_upsample.1} parent=0
    #allocation3 [shape = 'u8[65536]{0}', space=vmem, size = 0x10000, scoped, tag = 'output window, operand 0']
    #allocation4 [shape = 's32[2]{0}', space=sflag, size = 0x8, scoped, tag = 'scoped memory for bicubic_upsample.1']
    %8 = vsyncpa [#allocation4], 0
    %s9 = scalar_lea.sflag [#allocation4], 1
    %10 = vsyncpa %s9, 0
    loop: start=0, step=1, limit=6
    $region2: #{bicubic_upsample.1} parent=1 // loop_pre_header
      _
    $region3: #{bicubic_upsample.1} parent=1 // loop_header
      %s12 = sphi 0, %s16
      %p13 = scmp.ge.s32.totalorder %s12, 6
      %s20 = sphi 0, %s20
      %s22 = sphi 0, %s20
      %s23 = sphi 0, %s22
      %s37 = sphi 0, %s23
      %s41 = sphi 0, %s41
      %s43 = sphi 0, %s41
      %s44 = sphi 0, %s43
      %s58 = sphi 0, %s44
      %s64 = sphi 0, %s66
      %s67 = sphi 0, %s64
      %s68 = sphi 0, %s67
      %s84 = sphi 0, %s68
      %s90 = sphi 0, %s92
      %s93 = sphi 0, %s90
      %s94 = sphi 0, %s93
      %s110 = sphi 0, %s94
    $region4: #{bicubic_upsample.1} parent=1 // loop_header_branch
      %15 = sbr.rel (%p13) target = $region8
    $region5: #{bicubic_upsample.1} parent=1 // loop_body
      %s17 = ssub.s32 %s12, 1
      %s18 = ssub.s32 %s12, 2
      %s19 = sadd.s32 %s12, 1
      %s21 = sadd.s32 %s20, 1
      %p24 = scmp.eq.s32.totalorder %s12, 3
      %p25 = scmp.ne.s32.totalorder %s20, %s22
      %p26 = scmp.eq.s32.totalorder %s12, 0
      %p27 = por %p25, %p26
      %p28 = scmp.ne.s32.totalorder %s20, %s22
      %p29 = scmp.eq.s32.totalorder %s17, 3
      %p30 = por %p28, %p29
      %p31 = scmp.ne.s32.totalorder %s22, %s23
      %p32 = scmp.eq.s32.totalorder %s17, 0
      %p33 = por %p31, %p32
      %p34 = scmp.ne.s32.totalorder %s22, %s23
      %p35 = scmp.eq.s32.totalorder %s18, 3
      %p36 = por %p34, %p35
      %p38 = scmp.ne.s32.totalorder %s23, %s37
      %p39 = scmp.eq.s32.totalorder %s18, 0
      %p40 = por %p38, %p39
      %s42 = sadd.s32 %s41, 1
      %p45 = scmp.eq.s32.totalorder %s12, 3
      %p46 = scmp.ne.s32.totalorder %s41, %s43
      %p47 = scmp.eq.s32.totalorder %s12, 0
      %p48 = por %p46, %p47
      %p49 = scmp.ne.s32.totalorder %s41, %s43
      %p50 = scmp.eq.s32.totalorder %s17, 3
      %p51 = por %p49, %p50
      %p52 = scmp.ne.s32.totalorder %s43, %s44
      %p53 = scmp.eq.s32.totalorder %s17, 0
      %p54 = por %p52, %p53
      %p55 = scmp.ne.s32.totalorder %s43, %s44
      %p56 = scmp.eq.s32.totalorder %s18, 3
      %p57 = por %p55, %p56
      %p59 = scmp.ne.s32.totalorder %s44, %s58
      %p60 = scmp.eq.s32.totalorder %s18, 0
      %p61 = por %p59, %p60
      %s62 = ssub.s32 %s12, %s19
      %p63 = scmp.eq.s32.totalorder %s62, 0
      %s65 = sadd.s32 %s64, 1
      %s66 = scalar_select %p63, %s64, %s65
      %p69 = pneg %p63
      %p70 = scmp.eq.s32.totalorder %s12, 3
      %p71 = por %p69, %p70
      %p72 = scmp.ne.s32.totalorder %s64, %s67
      %p73 = scmp.eq.s32.totalorder %s12, 0
      %p74 = por %p72, %p73
      %p75 = scmp.ne.s32.totalorder %s64, %s67
      %p76 = scmp.eq.s32.totalorder %s17, 3
      %p77 = por %p75, %p76
      %p78 = scmp.ne.s32.totalorder %s67, %s68
      %p79 = scmp.eq.s32.totalorder %s17, 0
      %p80 = por %p78, %p79
      %p81 = scmp.ne.s32.totalorder %s67, %s68
      %p82 = scmp.eq.s32.totalorder %s18, 3
      %p83 = por %p81, %p82
      %p85 = scmp.ne.s32.totalorder %s68, %s84
      %p86 = scmp.eq.s32.totalorder %s18, 0
      %p87 = por %p85, %p86
      %s88 = ssub.s32 %s12, %s19
      %p89 = scmp.eq.s32.totalorder %s88, 0
      %s91 = sadd.s32 %s90, 1
      %s92 = scalar_select %p89, %s90, %s91
      %p95 = pneg %p89
      %p96 = scmp.eq.s32.totalorder %s12, 3
      %p97 = por %p95, %p96
      %p98 = scmp.ne.s32.totalorder %s90, %s93
      %p99 = scmp.eq.s32.totalorder %s12, 0
      %p100 = por %p98, %p99
      %p101 = scmp.ne.s32.totalorder %s90, %s93
      %p102 = scmp.eq.s32.totalorder %s17, 3
      %p103 = por %p101, %p102
      %p104 = scmp.ne.s32.totalorder %s93, %s94
      %p105 = scmp.eq.s32.totalorder %s17, 0
      %p106 = por %p104, %p105
      %p107 = scmp.ne.s32.totalorder %s93, %s94
      %p108 = scmp.eq.s32.totalorder %s18, 3
      %p109 = por %p107, %p108
      %p111 = scmp.ne.s32.totalorder %s94, %s110
      %p112 = scmp.eq.s32.totalorder %s18, 0
      %p113 = por %p111, %p112
      %p114 = scmp.le.s32.totalorder 1, %s12
      %p115 = scmp.lt.s32.totalorder %s12, 5
      %p116 = pnand %p114, %p115
      %p117 = pneg %p116
      // Predicated region
      $region9: #{bicubic_upsample.1} parent=5 // pred_check
        _
      $region10: #{bicubic_upsample.1} parent=5 // pred_check_branch
        %119 = sbr.rel (%p116) target = $region12
      $region11: #{bicubic_upsample.1} parent=5 // pred_region
        %s120 = ssub.s32 %s12, 1
        // Predicated region
        $region13: #{bicubic_upsample.1} parent=11 // pred_check
          %p121 = pneg %p33
        $region14: #{bicubic_upsample.1} parent=11 // pred_check_branch
          %123 = sbr.rel (%p121) target = $region16
        $region15: #{bicubic_upsample.1} parent=11 // pred_region
          _
        $region16: #{bicubic_upsample.1} parent=11 // pred_fallthru
          _
        // Predicated region
        $region17: #{bicubic_upsample.1} parent=11 // pred_check
          %p124 = pneg %p54
        $region18: #{bicubic_upsample.1} parent=11 // pred_check_branch
          %126 = sbr.rel (%p124) target = $region20
        $region19: #{bicubic_upsample.1} parent=11 // pred_region
          _
        $region20: #{bicubic_upsample.1} parent=11 // pred_fallthru
          _
      $region12: #{bicubic_upsample.1} parent=5 // pred_fallthru
        _
      %p127 = scmp.lt.s32.totalorder %s12, 4
      // Predicated region
      $region21: #{bicubic_upsample.1} parent=5 // pred_check
        %p128 = pneg %p127
      $region22: #{bicubic_upsample.1} parent=5 // pred_check_branch
        %130 = sbr.rel (%p128) target = $region24
      $region23: #{bicubic_upsample.1} parent=5 // pred_region
        // Predicated region
        $region25: #{bicubic_upsample.1} parent=23 // pred_check
          %p131 = pneg %p74
        $region26: #{bicubic_upsample.1} parent=23 // pred_check_branch
          %133 = sbr.rel (%p131) target = $region28
        $region27: #{bicubic_upsample.1} parent=23 // pred_region
          %s134 = smul.u32 2, %s12
          %p135 = scmp.lt.s32.totalorder %s134, 7
          %s136 = scalar_select %p135, %s134, 7
          %s137 = smul.addr %s136, 2
          %s138 = smul.addr %s137, 8
          %s139 = scalar_lea.vmem %s2, %s138
          %s140 = smul.u32 2, %s12
        $region28: #{bicubic_upsample.1} parent=23 // pred_fallthru
          _
      $region24: #{bicubic_upsample.1} parent=5 // pred_fallthru
        _
      %p141 = scmp.le.s32.totalorder 1, %s12
      %p142 = scmp.lt.s32.totalorder %s12, 5
      %p143 = pnand %p141, %p142
      %p144 = pneg %p143
      // Predicated region
      $region29: #{bicubic_upsample.1} parent=5 // pred_check
        _
      $region30: #{bicubic_upsample.1} parent=5 // pred_check_branch
        %146 = sbr.rel (%p143) target = $region32
      $region31: #{bicubic_upsample.1} parent=5 // pred_region
        %s147 = ssub.s32 %s12, 1
        %p148 = pneg %p33
        %p149 = pneg %p30
        %p150 = pneg %p54
        %p151 = pneg %p51
        %s152 = smul.u32 2, %s17
        %p153 = scmp.lt.s32.totalorder %s152, 7
        %s154 = scalar_select %p153, %s152, 7
        %s155 = smul.addr %s154, 2
        %s156 = smul.addr %s155, 8
        %s157 = scalar_lea.vmem %s2, %s156
        %p158 = pneg %p80
        %p159 = pneg %p77
        %p160 = pneg %p106
        %p161 = pneg %p103
        %s162 = sand.u32 %s93, 1
        %s163 = scalar_lea.sflag [#allocation4], %s162
        %s164 = sand.u32 %s93, 1
        %s165 = smul.addr %s164, 64
        %s166 = scalar_lea.vmem [#allocation3], %s165
        %s167 = smul.u32 2, %s17
        %p168 = scmp.lt.s32.totalorder %s167, 7
        %s169 = scalar_select %p168, %s167, 7
        %s170 = smul.addr %s169, 2
        %s171 = smul.addr %s170, 8
        %s172 = scalar_lea.vmem %s2, %s171
        %s173 = smul.u32 2, %s17
        %s174 = smul.u32 2, %s17
        %v175 = vld [vmem:[%s172] sm:$0xff]
        %v176 = vld [vmem:[%s172 + $0x8] sm:$0xff]
        %v177 = vld [vmem:[%s172 + $0x10] sm:$0xff]
        %v178 = vld [vmem:[%s172 + $0x18] sm:$0xff]
        %v179 = vld [vmem:[%s1] sm:$0xff]
        %v180 = vld [vmem:[%s1 + $0x8] sm:$0xff]
        %vm181 = vcmask 130048
        %v183 = vsel %vm181, %v175, 0
        %v186 = vsel %vm181, %v176, 0
        %v189 = vsel %vm181, %v177, 0
        %v192 = vsel %vm181, %v178, 0
        %194 = vmatpush.msra.mxu0 0.0
        %195 = vmatpush.msra.mxu0 0.0
        %196 = vmatpush.msra.mxu0 0.0
        %197 = vmatpush.msra.mxu0 0.0
        %198 = vmatpush.msra.mxu0 0.0
        %199 = vmatpush.msra.mxu0 0.0
        %200 = vmatpush.msra.mxu0 0.0
        %201 = vmatpush.msra.mxu0 0.0
        %202 = vmatpush.msra.mxu0 0.0
        %203 = vmatpush.msra.mxu0 0.0
        %204 = vmatpush.msra.mxu0 0.0
        %205 = vmatpush.msra.mxu0 0.0
        %206 = vmatpush.msra.mxu0 0.0
        %207 = vmatpush.msra.mxu0 0.0
        %208 = vmatpush.msra.mxu0 %v180
        %209 = vmatpush.msra.mxu0 %v179
        %210 = vmatmul.f32.gmra.mxu0 %v183
        %v211 = vpop.f32.mrf.mxu0
        %v212 = vadd.f32 0.0, %v211
        %213 = vmatmul.f32.gmra.mxu0 %v186
        %v214 = vpop.f32.mrf.mxu0
        %v215 = vadd.f32 0.0, %v214
        %216 = vmatmul.f32.gmra.mxu0 %v189
        %v217 = vpop.f32.mrf.mxu0
        %v218 = vadd.f32 0.0, %v217
        %219 = vmatmul.f32.gmra.mxu0 %v192
        %v220 = vpop.f32.mrf.mxu0
        %v221 = vadd.f32 0.0, %v220
        %222 = vdwg.mxu0
        %223 = vst [vmem:[#allocation2] sm:$0xff] %v212
        %224 = vst [vmem:[#allocation2 + $0x8] sm:$0xff] %v215
        %225 = vst [vmem:[#allocation2 + $0x10] sm:$0xff] %v218
        %226 = vst [vmem:[#allocation2 + $0x18] sm:$0xff] %v221
        %v227 = vld [vmem:[%s0] sm:$0xff]
        %v228 = vld [vmem:[%s0 + $0x8] sm:$0xff]
        %v229 = vld [vmem:[%s0 + $0x10] sm:$0xff]
        %v230 = vld [vmem:[%s0 + $0x18] sm:$0xff]
        %v231 = vld [vmem:[#allocation2] sm:$0xff]
        %v232 = vld [vmem:[#allocation2 + $0x8] sm:$0xff]
        %v234 = vsel %vm181, %v227, 0
        %v237 = vsel %vm181, %v228, 0
        %v240 = vsel %vm181, %v229, 0
        %v243 = vsel %vm181, %v230, 0
        %245 = vmatpush.msra.mxu0 0.0
        %246 = vmatpush.msra.mxu0 0.0
        %247 = vmatpush.msra.mxu0 0.0
        %248 = vmatpush.msra.mxu0 0.0
        %249 = vmatpush.msra.mxu0 0.0
        %250 = vmatpush.msra.mxu0 0.0
        %251 = vmatpush.msra.mxu0 0.0
        %252 = vmatpush.msra.mxu0 0.0
        %253 = vmatpush.msra.mxu0 0.0
        %254 = vmatpush.msra.mxu0 0.0
        %255 = vmatpush.msra.mxu0 0.0
        %256 = vmatpush.msra.mxu0 0.0
        %257 = vmatpush.msra.mxu0 0.0
        %258 = vmatpush.msra.mxu0 0.0
        %259 = vmatpush.msra.mxu0 %v232
        %260 = vmatpush.msra.mxu0 %v231
        %261 = vmatmul.f32.gmra.mxu0 %v234
        %v262 = vpop.f32.mrf.mxu0
        %v263 = vadd.f32 0.0, %v262
        %264 = vmatmul.f32.gmra.mxu0 %v237
        %v265 = vpop.f32.mrf.mxu0
        %v266 = vadd.f32 0.0, %v265
        %267 = vmatmul.f32.gmra.mxu0 %v240
        %v268 = vpop.f32.mrf.mxu0
        %v269 = vadd.f32 0.0, %v268
        %270 = vmatmul.f32.gmra.mxu0 %v243
        %v271 = vpop.f32.mrf.mxu0
        %v272 = vadd.f32 0.0, %v271
        %273 = vdwg.mxu0
        %274 = vst [vmem:[%s166] sm:$0xff] %v263
        %275 = vst [vmem:[%s166 + $0x8] sm:$0xff] %v266
        %276 = vst [vmem:[%s166 + $0x10] sm:$0xff] %v269
        %277 = vst [vmem:[%s166 + $0x18] sm:$0xff] %v272
        %s278 = scalar_lea.vmem [#allocation2], 16
        %v279 = vld [vmem:[%s278] sm:$0xff]
        %v280 = vld [vmem:[%s278 + $0x8] sm:$0xff]
        %281 = vmatpush.msra.mxu0 0.0
        %282 = vmatpush.msra.mxu0 0.0
        %283 = vmatpush.msra.mxu0 0.0
        %284 = vmatpush.msra.mxu0 0.0
        %285 = vmatpush.msra.mxu0 0.0
        %286 = vmatpush.msra.mxu0 0.0
        %287 = vmatpush.msra.mxu0 0.0
        %288 = vmatpush.msra.mxu0 0.0
        %289 = vmatpush.msra.mxu0 0.0
        %290 = vmatpush.msra.mxu0 0.0
        %291 = vmatpush.msra.mxu0 0.0
        %292 = vmatpush.msra.mxu0 0.0
        %293 = vmatpush.msra.mxu0 0.0
        %294 = vmatpush.msra.mxu0 0.0
        %295 = vmatpush.msra.mxu0 %v280
        %296 = vmatpush.msra.mxu0 %v279
        %297 = vmatmul.f32.gmra.mxu0 %v234
        %v298 = vpop.f32.mrf.mxu0
        %v299 = vadd.f32 0.0, %v298
        %300 = vmatmul.f32.gmra.mxu0 %v237
        %v301 = vpop.f32.mrf.mxu0
        %v302 = vadd.f32 0.0, %v301
        %303 = vmatmul.f32.gmra.mxu0 %v240
        %v304 = vpop.f32.mrf.mxu0
        %v305 = vadd.f32 0.0, %v304
        %306 = vmatmul.f32.gmra.mxu0 %v243
        %v307 = vpop.f32.mrf.mxu0
        %v308 = vadd.f32 0.0, %v307
        %309 = vdwg.mxu0
        %s310 = scalar_lea.vmem %s166, 32 [#allocation3]
        %311 = vst [vmem:[%s310] sm:$0xff] %v299
        %312 = vst [vmem:[%s310 + $0x8] sm:$0xff] %v302
        %313 = vst [vmem:[%s310 + $0x10] sm:$0xff] %v305
        %314 = vst [vmem:[%s310 + $0x18] sm:$0xff] %v308
        %s315 = sand.u32 %s93, 1
        %s316 = scalar_lea.sflag [#allocation4], %s315
        %s317 = sand.u32 %s93, 1
        %s318 = smul.addr %s317, 64
        %s319 = scalar_lea.vmem [#allocation3], %s318
        // Predicated region
        $region33: #{bicubic_upsample.1} parent=31 // pred_check
          %p320 = pneg %p103
        $region34: #{bicubic_upsample.1} parent=31 // pred_check_branch
          %322 = sbr.rel (%p320) target = $region36
        $region35: #{bicubic_upsample.1} parent=31 // pred_region
          %s323 = smul.u32 2, %s17
          %325 = vsyncadd %s316, 0
          %s326 = smul.addr %s323, 4
          %s327 = smul.addr %s326, 8
          %s328 = scalar_lea.hbm %s3, %s327
          %s329 = sshll.u32 %s319, 4
          %s330 = int_to_ptr.vmem [resolvable:$true] %s329
          %s331 = sshll.u32 %s328, 4
          %s332 = int_to_ptr.hbm [resolvable:$true] %s331
          %337 = dma.vmem_to_hbm [thread:$0]  %s330, 1024, %s332, %s316, 128, 128, 8
        $region36: #{bicubic_upsample.1} parent=31 // pred_fallthru
          _
      $region32: #{bicubic_upsample.1} parent=5 // pred_fallthru
        _
      %p338 = scmp.le.s32.totalorder 2, %s12
      // Predicated region
      $region37: #{bicubic_upsample.1} parent=5 // pred_check
        %p339 = pneg %p338
      $region38: #{bicubic_upsample.1} parent=5 // pred_check_branch
        %341 = sbr.rel (%p339) target = $region40
      $region39: #{bicubic_upsample.1} parent=5 // pred_region
        %s342 = ssub.s32 %s12, 2
        // Predicated region
        $region41: #{bicubic_upsample.1} parent=39 // pred_check
          %p343 = pneg %p109
        $region42: #{bicubic_upsample.1} parent=39 // pred_check_branch
          %345 = sbr.rel (%p343) target = $region44
        $region43: #{bicubic_upsample.1} parent=39 // pred_region
          %s346 = sand.u32 %s94, 1
          %s347 = scalar_lea.sflag [#allocation4], %s346
          %s348 = sand.u32 %s94, 1
          %s349 = smul.addr %s348, 64
          %s350 = scalar_lea.vmem [#allocation3], %s349
          %352 = dma.done %s347, 1024
        $region44: #{bicubic_upsample.1} parent=39 // pred_fallthru
          _
      $region40: #{bicubic_upsample.1} parent=5 // pred_fallthru
        _
    $region6: #{bicubic_upsample.1} parent=1 // loop_footer
      %s16 = sadd.s32 1, %s12
    $region7: #{bicubic_upsample.1} parent=1 // loop_footer_branch
      %11 = sbr.rel target = $region3
    $region8: #{bicubic_upsample.1} parent=1 // loop_exit
      _
    %353 = vsyncpa [#allocation4], 1
    %s354 = scalar_lea.sflag [#allocation4], 1
    %355 = vsyncpa %s354, 1

</llo_original>
